<compile_context>
chip_gen: v6e
topology: v6e:2x2x1
jax: 0.10.0
libtpu: 0.0.40
codegen_flags: <defaults>
</compile_context>

<pallas_src>
import functools

import jax
import jax.numpy as jnp
from jax import lax
from jax.experimental import pallas as pl
from jax.experimental.pallas import tpu as pltpu


def _round_up(x, m):
    return ((x + m - 1) // m) * m


def _ce_label_smooth_kernel(t_ref, x_ref, loss_ref, *, num_classes, epsilon):
    """Per-sample label-smoothed cross entropy (folded form).

    t_ref    : (TB, 1) int32   — ground-truth class ids
    x_ref    : (TB, C) float   — logits (pre-softmax), any float dtype
    loss_ref : (TB, 1) float32 — per-sample loss
    """
    x = x_ref[...].astype(jnp.float32)                              # (TB, C)

    # Numerically stable log-softmax pieces.
    m = jnp.max(x, axis=1, keepdims=True)                           # (TB, 1)
    shifted = x - m                                                 # (TB, C)
    lse = jnp.log(jnp.sum(jnp.exp(shifted), axis=1, keepdims=True)) # (TB, 1)

    # shifted[target] via a lane-iota compare + masked row-sum, plus the row
    # sum used by the uniform smoothing term.
    tgt = t_ref[...]                                                # (TB, 1)
    class_iota = lax.broadcasted_iota(jnp.int32, shifted.shape, 1)
    tgt_shifted = jnp.sum(
        jnp.where(class_iota == tgt, shifted, 0.0), axis=1, keepdims=True)
    sum_shifted = jnp.sum(shifted, axis=1, keepdims=True)

    # loss = -sum(q * log_probs),  q = (1-eps)*onehot + eps/C
    #      = lse - (1-eps)*shifted[target] - (eps/C)*sum(shifted)
    loss_ref[...] = (lse
                     - (1.0 - epsilon) * tgt_shifted
                     - (epsilon / num_classes) * sum_shifted)


def _choose_tile_b(B, C, itemsize):
    """Pick the batch-tile size TB from a VMEM budget."""
    # VMEM per element of a (TB, C) tile: 2x double-buffered input block
    # (itemsize bytes each) plus ~2 full-size f32 working copies in the body.
    bytes_per_elem = 2 * itemsize + 8
    budget = 24 * 1024 * 1024            # leaves headroom inside v7x's 64 MiB
    tb_vmem = max(8, budget // (bytes_per_elem * C))
    # Aim for >= 4 grid steps on large batches so the BlockSpec pipeline can
    # overlap the logits DMA with compute and both v7x TensorCores get tiles.
    tb_grid = _round_up(pl.cdiv(B, 4), 8) if B > 256 else B
    tb = min(int(tb_vmem), int(tb_grid), 1024)
    tb = max(8, (tb // 8) * 8)
    if tb >= B:
        return B
    # TODO(synk): for extremely large num_classes (row > a few MB even at
    # TB=8), add a class-axis grid dimension with online-LSE accumulation.
    return tb


def cross_entropy_label_smooth_hard_mining(
    inputs, targets, *, num_classes, epsilon=0.1, ratio=0.6
):
    """Matches CrossEntropyLabelSmoothHardMining.forward semantics.

    inputs : (B, C) float logits (kept in native dtype, e.g. bf16, for HBM BW)
    targets: (B,)   int class ids
    returns: scalar float32 loss
    """
    B, C = inputs.shape
    assert C == num_classes

    itemsize = jnp.dtype(inputs.dtype).itemsize
    tb = _choose_tile_b(B, C, itemsize)
    Bp = _round_up(B, tb)

    targets_col = targets.astype(jnp.int32).reshape(B, 1)
    if Bp != B:
        inputs = jnp.pad(inputs, ((0, Bp - B), (0, 0)))
        targets_col = jnp.pad(targets_col, ((0, Bp - B), (0, 0)))

    grid = (Bp // tb,)
    kernel = functools.partial(
        _ce_label_smooth_kernel, num_classes=num_classes, epsilon=epsilon)

    per_sample = pl.pallas_call(
        kernel,
        out_shape=jax.ShapeDtypeStruct((Bp, 1), jnp.float32),
        grid_spec=pltpu.PrefetchScalarGridSpec(
            num_scalar_prefetch=0,
            grid=grid,
            in_specs=[
                pl.BlockSpec((tb, 1), lambda i: (i, 0)),   # targets
                pl.BlockSpec((tb, C), lambda i: (i, 0)),   # logits
            ],
            out_specs=pl.BlockSpec((tb, 1), lambda i: (i, 0)),
        ),
        compiler_params=pltpu.CompilerParams(
            dimension_semantics=("parallel",),
            vmem_limit_bytes=48 * 1024 * 1024,
        ),
    )(targets_col, inputs)

    per_sample = per_sample.reshape(Bp)
    if Bp != B:
        # Padded rows must never be picked by hard mining.
        per_sample = jnp.where(jnp.arange(Bp) < B, per_sample, -jnp.inf)

    # Hard mining: top int(B * ratio) per-sample losses, averaged.
    selected_number = max(1, int(B * ratio))
    top_losses, _ = lax.top_k(per_sample, selected_number)
    return jnp.sum(top_losses) / selected_number


def _reference(inputs, targets, *, num_classes, epsilon=0.1, ratio=0.6):
    """Pure-JAX reference mirroring the PyTorch forward."""
    log_probs = jax.nn.log_softmax(inputs.astype(jnp.float32), axis=1)
    onehot = jax.nn.one_hot(targets, num_classes, dtype=jnp.float32)
    q = (1.0 - epsilon) * onehot + epsilon / num_classes
    loss = jnp.sum(-q * log_probs, axis=1)
    k = max(1, int(inputs.shape[0] * ratio))
    top = jnp.sort(loss)[::-1][:k]
    return jnp.sum(top) / k


if __name__ == "__main__":
    key = jax.random.PRNGKey(0)
    k1, k2, k3, k4 = jax.random.split(key, 4)

    # Case 1: small batch, single tile (typical small usage of the module).
    B, C = 8, 32
    x1 = jax.random.normal(k1, (B, C), dtype=jnp.float32)
    t1 = jax.random.randint(k2, (B,), 0, C, dtype=jnp.int32)
    out1 = jax.block_until_ready(
        cross_entropy_label_smooth_hard_mining(x1, t1, num_classes=C))
    ref1 = _reference(x1, t1, num_classes=C)
    assert jnp.allclose(out1, ref1, atol=1e-5, rtol=1e-5), (out1, ref1)

    # Case 2: multi-tile grid with batch padding (B=300 -> TB=80, grid=4).
    B2, C2 = 300, 64
    x2 = jax.random.normal(k3, (B2, C2), dtype=jnp.float32)
    t2 = jax.random.randint(k4, (B2,), 0, C2, dtype=jnp.int32)
    out2 = jax.block_until_ready(
        cross_entropy_label_smooth_hard_mining(x2, t2, num_classes=C2))
    ref2 = _reference(x2, t2, num_classes=C2)
    assert jnp.allclose(out2, ref2, atol=1e-4, rtol=1e-4), (out2, ref2)

    print("KERNEL_OK")
</pallas_src>

<mosaic_0001>
module attributes {stable_mosaic.version = 11 : i64} {
  func.func @_ce_label_smooth_kernel(%arg0: i32, %arg1: memref<8x1xi32, #tpu.memory_space<vmem>>, %arg2: memref<8x32xf32, #tpu.memory_space<vmem>>, %arg3: memref<8x1xf32, #tpu.memory_space<vmem>>) attributes {dimension_semantics = [#tpu.dimension_semantics<parallel>], iteration_bounds = array<i64: 1>, scalar_prefetch = 0 : i64, scratch_operands = 0 : i64, tpu.core_type = #tpu.core_type<tc>, window_params = [{transform_indices = @transform_0, window_bounds = array<i64: 8, 1>}, {transform_indices = @transform_1, window_bounds = array<i64: 8, 32>}, {transform_indices = @transform_2, window_bounds = array<i64: 8, 1>}]} {
    %c0 = arith.constant 0 : index
    %c0_0 = arith.constant 0 : index
    %0 = vector.load %arg2[%c0, %c0_0] : memref<8x32xf32, #tpu.memory_space<vmem>>, vector<8x32xf32>
    %cst = arith.constant dense<0xFF800000> : vector<8xf32>
    %1 = vector.multi_reduction <maximumf>, %0, %cst [1] : vector<8x32xf32> to vector<8xf32>
    %2 = vector.shape_cast %1 : vector<8xf32> to vector<8x1xf32>
    %3 = vector.broadcast %2 : vector<8x1xf32> to vector<8x32xf32>
    %4 = arith.subf %0, %3 : vector<8x32xf32>
    %5 = math.exp %4 : vector<8x32xf32>
    %cst_1 = arith.constant dense<0.000000e+00> : vector<8xf32>
    %6 = vector.multi_reduction <add>, %5, %cst_1 [1] : vector<8x32xf32> to vector<8xf32>
    %7 = vector.shape_cast %6 : vector<8xf32> to vector<8x1xf32>
    %8 = math.log %7 : vector<8x1xf32>
    %c0_2 = arith.constant 0 : index
    %c0_3 = arith.constant 0 : index
    %9 = vector.load %arg1[%c0_2, %c0_3] : memref<8x1xi32, #tpu.memory_space<vmem>>, vector<8x1xi32>
    %10 = tpu.iota {dimensions = array<i32: 1>} : vector<8x32xi32>
    %11 = vector.broadcast %9 : vector<8x1xi32> to vector<8x32xi32>
    %12 = arith.cmpi eq, %10, %11 : vector<8x32xi32>
    %cst_4 = arith.constant 0.000000e+00 : f32
    %13 = vector.broadcast %cst_4 : f32 to vector<8x32xf32>
    %14 = arith.select %12, %4, %13 : vector<8x32xi1>, vector<8x32xf32>
    %cst_5 = arith.constant dense<0.000000e+00> : vector<8xf32>
    %15 = vector.multi_reduction <add>, %14, %cst_5 [1] : vector<8x32xf32> to vector<8xf32>
    %16 = vector.shape_cast %15 : vector<8xf32> to vector<8x1xf32>
    %cst_6 = arith.constant dense<0.000000e+00> : vector<8xf32>
    %17 = vector.multi_reduction <add>, %4, %cst_6 [1] : vector<8x32xf32> to vector<8xf32>
    %18 = vector.shape_cast %17 : vector<8xf32> to vector<8x1xf32>
    %cst_7 = arith.constant 0.899999976 : f32
    %19 = vector.broadcast %cst_7 : f32 to vector<8x1xf32>
    %20 = arith.mulf %19, %16 : vector<8x1xf32>
    %21 = arith.subf %8, %20 : vector<8x1xf32>
    %cst_8 = arith.constant 3.125000e-03 : f32
    %22 = vector.broadcast %cst_8 : f32 to vector<8x1xf32>
    %23 = arith.mulf %22, %18 : vector<8x1xf32>
    %24 = arith.subf %21, %23 : vector<8x1xf32>
    %c0_9 = arith.constant 0 : index
    %c0_10 = arith.constant 0 : index
    %25 = vector.load %arg3[%c0_9, %c0_10] : memref<8x1xf32, #tpu.memory_space<vmem>>, vector<8x1xf32>
    tpu.vector_store %arg3[%c0_9, %c0_10], %24 {strides = array<i32>} : memref<8x1xf32, #tpu.memory_space<vmem>>, vector<8x1xf32>,
    return
  }
  func.func @transform_0(%arg0: i32) -> (i32, i32) {
    %c0_i32 = arith.constant 0 : i32
    %c0_i32_0 = arith.constant 0 : i32
    return %arg0, %c0_i32 : i32, i32
  }
  func.func @transform_1(%arg0: i32) -> (i32, i32) {
    %c0_i32 = arith.constant 0 : i32
    %c0_i32_0 = arith.constant 0 : i32
    return %arg0, %c0_i32 : i32, i32
  }
  func.func @transform_2(%arg0: i32) -> (i32, i32) {
    %c0_i32 = arith.constant 0 : i32
    %c0_i32_0 = arith.constant 0 : i32
    return %arg0, %c0_i32 : i32, i32
  }
}

</mosaic_0001>

<llo_original>
// kernel: tpu_custom_call.1
$region0: #{tpu_custom_call.1}
  #allocation0 [shape = 'u32[]', space=smem, size = 0x4, offset = 0x4, fixed_abs, tag = 'smem constant byte address 0x4 - core index']
  #allocation1 [shape = 'u32[144,128]{1,0:T(1,128)}', space=vmem, size = 0x12000, scoped, tag = 'internal scratch']
  %s0 = inlined_call_operand.vmem [shape: s32[8,1], index: 0, kind: input, shape index: {}]
  %s1 = inlined_call_operand.vmem [shape: f32[8,32], index: 1, kind: input, shape index: {}]
  %s2 = inlined_call_operand.vmem [shape: f32[8,1], index: 2, kind: output, shape index: {}]
  %s3 = sld [smem:[#allocation0]]
  $region18: #{tpu_custom_call.1} parent=0
    _
  %s5 = ssub.s32 1, %s3
  %s6 = scalar_select 0, %s5, %s3
  // Predicated region
  $region2: #{tpu_custom_call.1} parent=0 // pred_check
    _
  $region3: #{tpu_custom_call.1} parent=0 // pred_check_branch
    %8 = sbr.rel (0) target = $region5
  $region4: #{tpu_custom_call.1} parent=0 // pred_region
    _
  $region5: #{tpu_custom_call.1} parent=0 // pred_fallthru
    _
  // Predicated region
  $region6: #{tpu_custom_call.1} parent=0 // pred_check
    _
  $region7: #{tpu_custom_call.1} parent=0 // pred_check_branch
    %10 = sbr.rel (0) target = $region9
  $region8: #{tpu_custom_call.1} parent=0 // pred_region
    _
  $region9: #{tpu_custom_call.1} parent=0 // pred_fallthru
    _
  %v11 = vld [vmem:[%s1] sm:$0xff]
  %vm12 = vcmask 261120
  %v13 = vsel %vm12, %v11, -inf
  %14 = vmax.xlane.f32.xlu0 %v13
  %v15 = vpop.xlane.xlu0 %14
  %v16 = vsub.f32 %v11, %v15
  %v17 = vmul.f32 %v16, 1.442695
  %v18 = vpow.pop %v17
  %v19 = vsel %vm12, %v18, 0.0
  %20 = vadd.xlane.f32.xlu0 %v19
  %v21 = vpop.xlane.xlu0 %20
  %v22 = vlog2.pop %v21
  %v23 = vmul.f32 %v22, 0.6931472
  %v24 = vld [vmem:[%s0] sm:$0xff]
  %v25 = vlaneseq
  %v26 = vand.u32 %v25, 127
  %27 = vset.pattern.permute.xlu0 0
  %28 = vperm.xlu0 %27, %v24
  %v29 = vpop.permute.xlu0 %28
  %vm30 = vcmp.eq.s32.totalorder %v26, %v29
  %v31 = vsel %vm30, %v16, 0.0
  %v32 = vsel %vm12, %v31, 0.0
  %33 = vadd.xlane.f32.xlu0 %v32
  %v34 = vpop.xlane.xlu0 %33
  %v35 = vsel %vm12, %v16, 0.0
  %36 = vadd.xlane.f32.xlu0 %v35
  %v37 = vpop.xlane.xlu0 %36
  %v38 = vmul.f32 %v34, 0.9
  %v39 = vsub.f32 %v23, %v38
  %v40 = vmul.f32 %v37, 0.003125
  %v41 = vsub.f32 %v39, %v40
  %vm42 = vcmask 7168
  %43 = vst.msk [vmem:[%s2] sm:$0xff] %vm42, %v41
  // Predicated region
  $region10: #{tpu_custom_call.1} parent=0 // pred_check
    _
  $region11: #{tpu_custom_call.1} parent=0 // pred_check_branch
    %45 = sbr.rel (0) target = $region13
  $region12: #{tpu_custom_call.1} parent=0 // pred_region
    _
  $region13: #{tpu_custom_call.1} parent=0 // pred_fallthru
    _
  // Predicated region
  $region14: #{tpu_custom_call.1} parent=0 // pred_check
    _
  $region15: #{tpu_custom_call.1} parent=0 // pred_check_branch
    %47 = sbr.rel (0) target = $region17
  $region16: #{tpu_custom_call.1} parent=0 // pred_region
    _
  $region17: #{tpu_custom_call.1} parent=0 // pred_fallthru
    _

</llo_original>
